<compile_context>
chip_gen: v5e
topology: v5e:2x2
jax: 0.10.0
libtpu: 0.0.40
codegen_flags: <defaults>
</compile_context>

<pallas_src>
import functools

import jax
import jax.numpy as jnp
from jax.experimental import pallas as pl
from jax.experimental.pallas import tpu as pltpu


def _adaffine4_kernel(w1_ref, w2_ref, mu_ref, sigma_ref, x_ref, o_ref, *,
                      num_channels):
    C = num_channels
    # Band ("tap") matrix of the zero-padded 3-tap cross-correlation over channels:
    #   out[i] = w[0]*in[i-1] + w[1]*in[i] + w[2]*in[i+1]   (out-of-range taps = 0)
    i_idx = jax.lax.broadcasted_iota(jnp.int32, (C, C), 0)   # output channel (sublane)
    j_idx = jax.lax.broadcasted_iota(jnp.int32, (C, C), 1)   # source channel (lane)
    d = j_idx - i_idx

    def taps(w_ref):
        return (jnp.where(d == -1, w_ref[0], 0.0)
                + jnp.where(d == 0, w_ref[1], 0.0)
                + jnp.where(d == 1, w_ref[2], 0.0))

    mu_row = mu_ref[...].astype(jnp.float32)      # (1, C), channels along lanes
    sg_row = sigma_ref[...].astype(jnp.float32)   # (1, C)

    # (C, C) * (1, C) broadcast, then lane reduction -> per-channel columns (C, 1).
    mu_l = jnp.sum(taps(w1_ref) * mu_row, axis=1, keepdims=True)     # (C, 1)
    z = jnp.sum(taps(w2_ref) * sg_row, axis=1, keepdims=True)        # (C, 1)
    # softplus with the PyTorch threshold (=20); exp/log run on the EUP.
    sigma_l = jnp.where(z > 20.0, z,
                        jnp.log(1.0 + jnp.exp(jnp.minimum(z, 20.0))))

    # Main HBM-bound pass: lane-dense (C, TILE_HW) block, cheap lane-broadcast FMA.
    x = x_ref[...].astype(jnp.float32)
    o_ref[...] = (x * sigma_l + mu_l).astype(o_ref.dtype)


def _round_up(x, m):
    return (x + m - 1) // m * m


def _choose_tile_hw(C, HW, itemsize, vmem_budget_bytes=12 * 1024 * 1024):
    """Pick a spatial tile: multiple of 128, capped at 2048, fits the VMEM budget."""
    hw128 = _round_up(HW, 128)
    # Per lane column: double-buffered in + out blocks plus ~2 f32 temporaries.
    per_lane = C * (4 * itemsize + 2 * 4)
    max_tile = max(128, (vmem_budget_bytes // per_lane) // 128 * 128)
    tile = min(2048, max_tile, hw128)
    hw_pad = _round_up(HW, tile)
    return tile, hw_pad


def adaffine4(result, mu, sigma, conv1_weight, conv2_weight):
    """result: (N,C,H,W); mu, sigma: (N,C,1,1); conv*_weight: (1,1,3) or (3,)."""
    N, C, H, W = result.shape
    HW = H * W
    itemsize = jnp.dtype(result.dtype).itemsize
    tile_hw, hw_pad = _choose_tile_hw(C, HW, itemsize)
    n_spatial = hw_pad // tile_hw

    x2 = result.reshape(N, C, HW)
    if hw_pad != HW:
        x2 = jnp.pad(x2, ((0, 0), (0, 0), (0, hw_pad - HW)))
    mu2 = mu.reshape(N, 1, C)
    sigma2 = sigma.reshape(N, 1, C)
    w1 = conv1_weight.reshape(3).astype(jnp.float32)
    w2 = conv2_weight.reshape(3).astype(jnp.float32)

    # Explicit VMEM budget: double-buffered in/out blocks + f32 temporaries + stats + slack.
    needed = (4 * C * tile_hw * itemsize + 4 * C * tile_hw * 4
              + 4 * C * C * 4 + 16 * C * 4 + (1 << 20))
    vmem_limit = int(min(40 * 1024 * 1024, max(4 * 1024 * 1024, needed)))

    kernel = functools.partial(_adaffine4_kernel, num_channels=C)

    out = pl.pallas_call(
        kernel,
        out_shape=jax.ShapeDtypeStruct((N, C, hw_pad), result.dtype),
        grid_spec=pltpu.PrefetchScalarGridSpec(
            num_scalar_prefetch=0,
            grid=(N, n_spatial),
            in_specs=[
                pl.BlockSpec(memory_space=pltpu.MemorySpace.SMEM),          # w1 (3,)
                pl.BlockSpec(memory_space=pltpu.MemorySpace.SMEM),          # w2 (3,)
                pl.BlockSpec((None, 1, C), lambda n, s: (n, 0, 0)),         # mu    -> (1, C)
                pl.BlockSpec((None, 1, C), lambda n, s: (n, 0, 0)),         # sigma -> (1, C)
                pl.BlockSpec((None, C, tile_hw), lambda n, s: (n, 0, s)),   # x     -> (C, T)
            ],
            out_specs=pl.BlockSpec((None, C, tile_hw), lambda n, s: (n, 0, s)),
        ),
        compiler_params=pltpu.CompilerParams(
            dimension_semantics=("parallel", "parallel"),
            vmem_limit_bytes=vmem_limit,
        ),
    )(w1, w2, mu2, sigma2, x2)

    if hw_pad != HW:
        out = out[:, :, :HW]
    return out.reshape(N, C, H, W)


def _reference(result, mu, sigma, w1, w2):
    """Pure-JAX reference matching the PyTorch module exactly."""
    N, C = result.shape[0], result.shape[1]
    mu_v = mu.reshape(N, C)
    sg_v = sigma.reshape(N, C)

    def conv3(v, w):  # zero-padded 3-tap cross-correlation over channels
        vp = jnp.pad(v, ((0, 0), (1, 1)))
        return w[0] * vp[:, 0:C] + w[1] * vp[:, 1:C + 1] + w[2] * vp[:, 2:C + 2]

    def softplus(z):  # PyTorch softplus (threshold=20)
        return jnp.where(z > 20.0, z, jnp.log1p(jnp.exp(jnp.minimum(z, 20.0))))

    mu_l = conv3(mu_v, w1)
    sg_l = softplus(conv3(sg_v, w2))
    return result * sg_l[:, :, None, None] + mu_l[:, :, None, None]


if __name__ == "__main__":
    key = jax.random.PRNGKey(0)
    k1, k2, k3, k4, k5 = jax.random.split(key, 5)
    N, C, H, W = 2, 4, 16, 16
    result = jax.random.normal(k1, (N, C, H, W), dtype=jnp.float32)
    mu = jax.random.normal(k2, (N, C, 1, 1), dtype=jnp.float32)
    sigma = jax.random.normal(k3, (N, C, 1, 1), dtype=jnp.float32)
    conv1_weight = 0.5 * jax.random.normal(k4, (1, 1, 3), dtype=jnp.float32)
    conv2_weight = 0.5 * jax.random.normal(k5, (1, 1, 3), dtype=jnp.float32)

    out = adaffine4(result, mu, sigma, conv1_weight, conv2_weight)
    out = jax.block_until_ready(out)

    ref = _reference(result, mu, sigma, conv1_weight.reshape(3), conv2_weight.reshape(3))
    assert out.shape == result.shape
    assert jnp.allclose(out, ref, atol=1e-5, rtol=1e-5), "mismatch vs reference"

    print("KERNEL_OK")
</pallas_src>

<mosaic_0001>
module attributes {stable_mosaic.version = 11 : i64} {
  func.func @_adaffine4_kernel(%arg0: i32, %arg1: i32, %arg2: memref<3xf32, #tpu.memory_space<smem>>, %arg3: memref<3xf32, #tpu.memory_space<smem>>, %arg4: memref<1x1x4xf32, #tpu.memory_space<vmem>>, %arg5: memref<1x1x4xf32, #tpu.memory_space<vmem>>, %arg6: memref<1x4x256xf32, #tpu.memory_space<vmem>>, %arg7: memref<1x4x256xf32, #tpu.memory_space<vmem>>) attributes {dimension_semantics = [#tpu.dimension_semantics<parallel>, #tpu.dimension_semantics<parallel>], iteration_bounds = array<i64: 2, 1>, scalar_prefetch = 0 : i64, scratch_operands = 0 : i64, tpu.core_type = #tpu.core_type<tc>, window_params = [{transform_indices = @transform_0, window_bounds = array<i64: 3>}, {transform_indices = @transform_1, window_bounds = array<i64: 3>}, {transform_indices = @transform_2, window_bounds = array<i64: 1, 1, 4>}, {transform_indices = @transform_3, window_bounds = array<i64: 1, 1, 4>}, {transform_indices = @transform_4, window_bounds = array<i64: 1, 4, 256>}, {transform_indices = @transform_5, window_bounds = array<i64: 1, 4, 256>}]} {
    %0 = tpu.iota {dimensions = array<i32: 0>} : vector<4x4xi32>
    %1 = tpu.iota {dimensions = array<i32: 1>} : vector<4x4xi32>
    %2 = arith.subi %1, %0 : vector<4x4xi32>
    %c0 = arith.constant 0 : index
    %c0_0 = arith.constant 0 : index
    %c0_1 = arith.constant 0 : index
    %3 = vector.load %arg4[%c0, %c0_0, %c0_1] : memref<1x1x4xf32, #tpu.memory_space<vmem>>, vector<1x1x4xf32>
    %4 = vector.shape_cast %3 : vector<1x1x4xf32> to vector<1x4xf32>
    %c0_2 = arith.constant 0 : index
    %c0_3 = arith.constant 0 : index
    %c0_4 = arith.constant 0 : index
    %5 = vector.load %arg5[%c0_2, %c0_3, %c0_4] : memref<1x1x4xf32, #tpu.memory_space<vmem>>, vector<1x1x4xf32>
    %6 = vector.shape_cast %5 : vector<1x1x4xf32> to vector<1x4xf32>
    %c-1_i32 = arith.constant -1 : i32
    %7 = vector.broadcast %c-1_i32 : i32 to vector<4x4xi32>
    %8 = arith.cmpi eq, %2, %7 : vector<4x4xi32>
    %c0_5 = arith.constant 0 : index
    %9 = memref.load %arg2[%c0_5] : memref<3xf32, #tpu.memory_space<smem>>
    %cst = arith.constant 0.000000e+00 : f32
    %10 = vector.broadcast %9 : f32 to vector<4x4xf32>
    %11 = vector.broadcast %cst : f32 to vector<4x4xf32>
    %12 = arith.select %8, %10, %11 : vector<4x4xi1>, vector<4x4xf32>
    %c0_i32 = arith.constant 0 : i32
    %13 = vector.broadcast %c0_i32 : i32 to vector<4x4xi32>
    %14 = arith.cmpi eq, %2, %13 : vector<4x4xi32>
    %c1 = arith.constant 1 : index
    %15 = memref.load %arg2[%c1] : memref<3xf32, #tpu.memory_space<smem>>
    %cst_6 = arith.constant 0.000000e+00 : f32
    %16 = vector.broadcast %15 : f32 to vector<4x4xf32>
    %17 = vector.broadcast %cst_6 : f32 to vector<4x4xf32>
    %18 = arith.select %14, %16, %17 : vector<4x4xi1>, vector<4x4xf32>
    %19 = arith.addf %12, %18 : vector<4x4xf32>
    %c1_i32 = arith.constant 1 : i32
    %20 = vector.broadcast %c1_i32 : i32 to vector<4x4xi32>
    %21 = arith.cmpi eq, %2, %20 : vector<4x4xi32>
    %c2 = arith.constant 2 : index
    %22 = memref.load %arg2[%c2] : memref<3xf32, #tpu.memory_space<smem>>
    %cst_7 = arith.constant 0.000000e+00 : f32
    %23 = vector.broadcast %22 : f32 to vector<4x4xf32>
    %24 = vector.broadcast %cst_7 : f32 to vector<4x4xf32>
    %25 = arith.select %21, %23, %24 : vector<4x4xi1>, vector<4x4xf32>
    %26 = arith.addf %19, %25 : vector<4x4xf32>
    %27 = vector.broadcast %4 : vector<1x4xf32> to vector<4x4xf32>
    %28 = arith.mulf %26, %27 : vector<4x4xf32>
    %cst_8 = arith.constant dense<0.000000e+00> : vector<4xf32>
    %29 = vector.multi_reduction <add>, %28, %cst_8 [1] : vector<4x4xf32> to vector<4xf32>
    %30 = vector.shape_cast %29 : vector<4xf32> to vector<4x1xf32>
    %c-1_i32_9 = arith.constant -1 : i32
    %31 = vector.broadcast %c-1_i32_9 : i32 to vector<4x4xi32>
    %32 = arith.cmpi eq, %2, %31 : vector<4x4xi32>
    %c0_10 = arith.constant 0 : index
    %33 = memref.load %arg3[%c0_10] : memref<3xf32, #tpu.memory_space<smem>>
    %cst_11 = arith.constant 0.000000e+00 : f32
    %34 = vector.broadcast %33 : f32 to vector<4x4xf32>
    %35 = vector.broadcast %cst_11 : f32 to vector<4x4xf32>
    %36 = arith.select %32, %34, %35 : vector<4x4xi1>, vector<4x4xf32>
    %c0_i32_12 = arith.constant 0 : i32
    %37 = vector.broadcast %c0_i32_12 : i32 to vector<4x4xi32>
    %38 = arith.cmpi eq, %2, %37 : vector<4x4xi32>
    %c1_13 = arith.constant 1 : index
    %39 = memref.load %arg3[%c1_13] : memref<3xf32, #tpu.memory_space<smem>>
    %cst_14 = arith.constant 0.000000e+00 : f32
    %40 = vector.broadcast %39 : f32 to vector<4x4xf32>
    %41 = vector.broadcast %cst_14 : f32 to vector<4x4xf32>
    %42 = arith.select %38, %40, %41 : vector<4x4xi1>, vector<4x4xf32>
    %43 = arith.addf %36, %42 : vector<4x4xf32>
    %c1_i32_15 = arith.constant 1 : i32
    %44 = vector.broadcast %c1_i32_15 : i32 to vector<4x4xi32>
    %45 = arith.cmpi eq, %2, %44 : vector<4x4xi32>
    %c2_16 = arith.constant 2 : index
    %46 = memref.load %arg3[%c2_16] : memref<3xf32, #tpu.memory_space<smem>>
    %cst_17 = arith.constant 0.000000e+00 : f32
    %47 = vector.broadcast %46 : f32 to vector<4x4xf32>
    %48 = vector.broadcast %cst_17 : f32 to vector<4x4xf32>
    %49 = arith.select %45, %47, %48 : vector<4x4xi1>, vector<4x4xf32>
    %50 = arith.addf %43, %49 : vector<4x4xf32>
    %51 = vector.broadcast %6 : vector<1x4xf32> to vector<4x4xf32>
    %52 = arith.mulf %50, %51 : vector<4x4xf32>
    %cst_18 = arith.constant dense<0.000000e+00> : vector<4xf32>
    %53 = vector.multi_reduction <add>, %52, %cst_18 [1] : vector<4x4xf32> to vector<4xf32>
    %54 = vector.shape_cast %53 : vector<4xf32> to vector<4x1xf32>
    %cst_19 = arith.constant 2.000000e+01 : f32
    %55 = vector.broadcast %cst_19 : f32 to vector<4x1xf32>
    %56 = arith.cmpf ogt, %54, %55 : vector<4x1xf32>
    %cst_20 = arith.constant 2.000000e+01 : f32
    %57 = vector.broadcast %cst_20 : f32 to vector<4x1xf32>
    %58 = arith.minimumf %54, %57 : vector<4x1xf32>
    %59 = math.exp %58 : vector<4x1xf32>
    %cst_21 = arith.constant 1.000000e+00 : f32
    %60 = vector.broadcast %cst_21 : f32 to vector<4x1xf32>
    %61 = arith.addf %60, %59 : vector<4x1xf32>
    %62 = math.log %61 : vector<4x1xf32>
    %63 = arith.select %56, %54, %62 : vector<4x1xi1>, vector<4x1xf32>
    %c0_22 = arith.constant 0 : index
    %c0_23 = arith.constant 0 : index
    %c0_24 = arith.constant 0 : index
    %64 = vector.load %arg6[%c0_22, %c0_23, %c0_24] : memref<1x4x256xf32, #tpu.memory_space<vmem>>, vector<1x4x256xf32>
    %65 = vector.shape_cast %64 : vector<1x4x256xf32> to vector<4x256xf32>
    %66 = vector.broadcast %63 : vector<4x1xf32> to vector<4x256xf32>
    %67 = arith.mulf %65, %66 : vector<4x256xf32>
    %68 = vector.broadcast %30 : vector<4x1xf32> to vector<4x256xf32>
    %69 = arith.addf %67, %68 : vector<4x256xf32>
    %c0_25 = arith.constant 0 : index
    %c0_26 = arith.constant 0 : index
    %c0_27 = arith.constant 0 : index
    %70 = vector.load %arg7[%c0_25, %c0_26, %c0_27] : memref<1x4x256xf32, #tpu.memory_space<vmem>>, vector<1x4x256xf32>
    %71 = vector.shape_cast %70 : vector<1x4x256xf32> to vector<4x256xf32>
    %72 = vector.shape_cast %69 : vector<4x256xf32> to vector<1x4x256xf32>
    tpu.vector_store %arg7[%c0_25, %c0_26, %c0_27], %72 {strides = array<i32>} : memref<1x4x256xf32, #tpu.memory_space<vmem>>, vector<1x4x256xf32>,
    return
  }
  func.func @transform_0(%arg0: i32, %arg1: i32) -> i32 {
    %c0_i32 = arith.constant 0 : i32
    %c0_i32_0 = arith.constant 0 : i32
    return %c0_i32 : i32
  }
  func.func @transform_1(%arg0: i32, %arg1: i32) -> i32 {
    %c0_i32 = arith.constant 0 : i32
    %c0_i32_0 = arith.constant 0 : i32
    return %c0_i32 : i32
  }
  func.func @transform_2(%arg0: i32, %arg1: i32) -> (i32, i32, i32) {
    %c0_i32 = arith.constant 0 : i32
    %c0_i32_0 = arith.constant 0 : i32
    %c0_i32_1 = arith.constant 0 : i32
    return %arg0, %c0_i32, %c0_i32_0 : i32, i32, i32
  }
  func.func @transform_3(%arg0: i32, %arg1: i32) -> (i32, i32, i32) {
    %c0_i32 = arith.constant 0 : i32
    %c0_i32_0 = arith.constant 0 : i32
    %c0_i32_1 = arith.constant 0 : i32
    return %arg0, %c0_i32, %c0_i32_0 : i32, i32, i32
  }
  func.func @transform_4(%arg0: i32, %arg1: i32) -> (i32, i32, i32) {
    %c0_i32 = arith.constant 0 : i32
    %c0_i32_0 = arith.constant 0 : i32
    return %arg0, %c0_i32, %arg1 : i32, i32, i32
  }
  func.func @transform_5(%arg0: i32, %arg1: i32) -> (i32, i32, i32) {
    %c0_i32 = arith.constant 0 : i32
    %c0_i32_0 = arith.constant 0 : i32
    return %arg0, %c0_i32, %arg1 : i32, i32, i32
  }
}

</mosaic_0001>

<llo_original>
// kernel: tpu_custom_call.1
$region0: #{tpu_custom_call.1}
  #allocation0 [shape = 'u32[]', space=smem, size = 0x4, offset = 0x4, fixed_abs, tag = 'smem constant byte address 0x4 - core index']
  #allocation1 [shape = 'u32[72,128]{1,0:T(1,128)}', space=vmem, size = 0x9000, scoped, tag = 'internal scratch']
  %s0 = inlined_call_operand.hbm [shape: f32[3], index: 0, kind: input, shape index: {}]
  %s1 = inlined_call_operand.hbm [shape: f32[3], index: 1, kind: input, shape index: {}]
  %s2 = inlined_call_operand.hbm [shape: f32[2,1,4], index: 2, kind: input, shape index: {}]
  %s3 = inlined_call_operand.vmem [shape: f32[2,1,4], index: 3, kind: input, shape index: {}]
  %s4 = inlined_call_operand.hbm [shape: f32[2,4,256], index: 4, kind: input, shape index: {}]
  %s5 = inlined_call_operand.hbm [shape: f32[2,4,256], index: 5, kind: output, shape index: {}]
  %s6 = sld [smem:[#allocation0]]
  $region69: #{tpu_custom_call.1} parent=0
    _
  %s8 = ssub.s32 1, %s6
  %s9 = scalar_select 0, %s8, %s6
  $region1: #{tpu_custom_call.1} parent=0
    #allocation2 [shape = 'u8[512]{0}', space=smem, size = 0x200, scoped, tag = 'input window, operand 0, single buffered']
    #allocation3 [shape = 's32[2]{0}', space=sflag, size = 0x8, scoped, tag = 'scoped memory for tpu_custom_call.1']
    #allocation4 [shape = 's32[2]{0}', space=sflag, size = 0x8, scoped, tag = 'scoped memory for tpu_custom_call.1']
    #allocation5 [shape = 's32[2]{0}', space=sflag, size = 0x8, scoped, tag = 'scoped memory for tpu_custom_call.1']
    #allocation6 [shape = 'u8[512]{0}', space=smem, size = 0x200, scoped, tag = 'input window, operand 1, single buffered']
    #allocation7 [shape = 's32[1]{0}', space=sflag, size = 0x4, scoped, tag = 'scoped memory for tpu_custom_call.1']
    #allocation8 [shape = 'u8[1024]{0}', space=vmem, size = 0x400, scoped, tag = 'input window, operand 2']
    #allocation9 [shape = 'u8[8192]{0}', space=vmem, size = 0x2000, scoped, tag = 'input window, operand 4']
    #allocation10 [shape = 's32[2]{0}', space=sflag, size = 0x8, scoped, tag = 'scoped memory for tpu_custom_call.1']
    #allocation11 [shape = 'u8[8192]{0}', space=vmem, size = 0x2000, scoped, tag = 'output window, operand 0']
    %10 = vsyncpa [#allocation5], 0
    %11 = vsyncpa [#allocation7], 0
    %12 = vsyncpa [#allocation3], 0
    %s13 = scalar_lea.sflag [#allocation3], 1
    %14 = vsyncpa %s13, 0
    %15 = vsyncpa [#allocation10], 0
    %s16 = scalar_lea.sflag [#allocation10], 1
    %17 = vsyncpa %s16, 0
    %18 = vsyncpa [#allocation4], 0
    %s19 = scalar_lea.sflag [#allocation4], 1
    %20 = vsyncpa %s19, 0
    loop: start=0, step=1, limit=4
    $region2: #{tpu_custom_call.1} parent=1 // loop_pre_header
      _
    $region3: #{tpu_custom_call.1} parent=1 // loop_header
      %s22 = sphi 0, %s26
      %p23 = scmp.ge.s32.totalorder %s22, 4
      %s29 = sphi 0, %s41
      %s30 = sphi 0, %s37
      %s31 = sphi 0, %s29
      %s32 = sphi 0, %s30
      %s33 = sphi 0, %s31
      %s34 = sphi 0, %s32
      %s42 = sphi 0, %s42
      %s44 = sphi 0, %s42
      %s45 = sphi 0, %s44
      %s59 = sphi 0, %s45
      %s63 = sphi 0, %s63
      %s65 = sphi 0, %s63
      %s66 = sphi 0, %s65
      %s80 = sphi 0, %s66
      %s86 = sphi 0, %s88
      %s89 = sphi 0, %s86
      %s90 = sphi 0, %s89
      %s106 = sphi 0, %s90
      %s112 = sphi 0, %s114
      %s115 = sphi 0, %s112
      %s116 = sphi 0, %s115
      %s132 = sphi 0, %s116
      %s140 = sphi 0, %s142
      %s143 = sphi 0, %s140
      %s144 = sphi 0, %s143
      %s160 = sphi 0, %s144
      %s168 = sphi 0, %s170
      %s171 = sphi 0, %s168
      %s172 = sphi 0, %s171
      %s188 = sphi 0, %s172
    $region4: #{tpu_custom_call.1} parent=1 // loop_header_branch
      %25 = sbr.rel (%p23) target = $region8
    $region5: #{tpu_custom_call.1} parent=1 // loop_body
      %s27 = ssub.s32 %s22, 1
      %s28 = ssub.s32 %s22, 2
      %s35 = sadd.s32 1, %s30
      %p36 = scmp.ge.s32.totalorder %s35, 1
      %s37 = scalar_select %p36, 0, %s35
      %s38 = sadd.s32 1, %s29
      %s39 = scalar_select %p36, %s38, %s29
      %p40 = scmp.ge.s32.totalorder %s39, 2
      %s41 = scalar_select %p40, 0, %s39
      %s43 = sadd.s32 %s42, 1
      %p46 = scmp.eq.s32.totalorder %s22, 1
      %p47 = scmp.ne.s32.totalorder %s42, %s44
      %p48 = scmp.eq.s32.totalorder %s22, 0
      %p49 = por %p47, %p48
      %p50 = scmp.ne.s32.totalorder %s42, %s44
      %p51 = scmp.eq.s32.totalorder %s27, 1
      %p52 = por %p50, %p51
      %p53 = scmp.ne.s32.totalorder %s44, %s45
      %p54 = scmp.eq.s32.totalorder %s27, 0
      %p55 = por %p53, %p54
      %p56 = scmp.ne.s32.totalorder %s44, %s45
      %p57 = scmp.eq.s32.totalorder %s28, 1
      %p58 = por %p56, %p57
      %p60 = scmp.ne.s32.totalorder %s45, %s59
      %p61 = scmp.eq.s32.totalorder %s28, 0
      %p62 = por %p60, %p61
      %s64 = sadd.s32 %s63, 1
      %p67 = scmp.eq.s32.totalorder %s22, 1
      %p68 = scmp.ne.s32.totalorder %s63, %s65
      %p69 = scmp.eq.s32.totalorder %s22, 0
      %p70 = por %p68, %p69
      %p71 = scmp.ne.s32.totalorder %s63, %s65
      %p72 = scmp.eq.s32.totalorder %s27, 1
      %p73 = por %p71, %p72
      %p74 = scmp.ne.s32.totalorder %s65, %s66
      %p75 = scmp.eq.s32.totalorder %s27, 0
      %p76 = por %p74, %p75
      %p77 = scmp.ne.s32.totalorder %s65, %s66
      %p78 = scmp.eq.s32.totalorder %s28, 1
      %p79 = por %p77, %p78
      %p81 = scmp.ne.s32.totalorder %s66, %s80
      %p82 = scmp.eq.s32.totalorder %s28, 0
      %p83 = por %p81, %p82
      %s84 = ssub.s32 %s29, %s41
      %p85 = scmp.eq.s32.totalorder %s84, 0
      %s87 = sadd.s32 %s86, 1
      %s88 = scalar_select %p85, %s86, %s87
      %p91 = pneg %p85
      %p92 = scmp.eq.s32.totalorder %s22, 1
      %p93 = por %p91, %p92
      %p94 = scmp.ne.s32.totalorder %s86, %s89
      %p95 = scmp.eq.s32.totalorder %s22, 0
      %p96 = por %p94, %p95
      %p97 = scmp.ne.s32.totalorder %s86, %s89
      %p98 = scmp.eq.s32.totalorder %s27, 1
      %p99 = por %p97, %p98
      %p100 = scmp.ne.s32.totalorder %s89, %s90
      %p101 = scmp.eq.s32.totalorder %s27, 0
      %p102 = por %p100, %p101
      %p103 = scmp.ne.s32.totalorder %s89, %s90
      %p104 = scmp.eq.s32.totalorder %s28, 1
      %p105 = por %p103, %p104
      %p107 = scmp.ne.s32.totalorder %s90, %s106
      %p108 = scmp.eq.s32.totalorder %s28, 0
      %p109 = por %p107, %p108
      %s110 = ssub.s32 %s29, %s41
      %p111 = scmp.eq.s32.totalorder %s110, 0
      %s113 = sadd.s32 %s112, 1
      %s114 = scalar_select %p111, %s112, %s113
      %p117 = pneg %p111
      %p118 = scmp.eq.s32.totalorder %s22, 1
      %p119 = por %p117, %p118
      %p120 = scmp.ne.s32.totalorder %s112, %s115
      %p121 = scmp.eq.s32.totalorder %s22, 0
      %p122 = por %p120, %p121
      %p123 = scmp.ne.s32.totalorder %s112, %s115
      %p124 = scmp.eq.s32.totalorder %s27, 1
      %p125 = por %p123, %p124
      %p126 = scmp.ne.s32.totalorder %s115, %s116
      %p127 = scmp.eq.s32.totalorder %s27, 0
      %p128 = por %p126, %p127
      %p129 = scmp.ne.s32.totalorder %s115, %s116
      %p130 = scmp.eq.s32.totalorder %s28, 1
      %p131 = por %p129, %p130
      %p133 = scmp.ne.s32.totalorder %s116, %s132
      %p134 = scmp.eq.s32.totalorder %s28, 0
      %p135 = por %p133, %p134
      %s136 = ssub.s32 %s29, %s41
      %s137 = ssub.s32 %s30, %s37
      %s138 = sor.u32 %s136, %s137
      %p139 = scmp.eq.s32.totalorder %s138, 0
      %s141 = sadd.s32 %s140, 1
      %s142 = scalar_select %p139, %s140, %s141
      %p145 = pneg %p139
      %p146 = scmp.eq.s32.totalorder %s22, 1
      %p147 = por %p145, %p146
      %p148 = scmp.ne.s32.totalorder %s140, %s143
      %p149 = scmp.eq.s32.totalorder %s22, 0
      %p150 = por %p148, %p149
      %p151 = scmp.ne.s32.totalorder %s140, %s143
      %p152 = scmp.eq.s32.totalorder %s27, 1
      %p153 = por %p151, %p152
      %p154 = scmp.ne.s32.totalorder %s143, %s144
      %p155 = scmp.eq.s32.totalorder %s27, 0
      %p156 = por %p154, %p155
      %p157 = scmp.ne.s32.totalorder %s143, %s144
      %p158 = scmp.eq.s32.totalorder %s28, 1
      %p159 = por %p157, %p158
      %p161 = scmp.ne.s32.totalorder %s144, %s160
      %p162 = scmp.eq.s32.totalorder %s28, 0
      %p163 = por %p161, %p162
      %s164 = ssub.s32 %s29, %s41
      %s165 = ssub.s32 %s30, %s37
      %s166 = sor.u32 %s164, %s165
      %p167 = scmp.eq.s32.totalorder %s166, 0
      %s169 = sadd.s32 %s168, 1
      %s170 = scalar_select %p167, %s168, %s169
      %p173 = pneg %p167
      %p174 = scmp.eq.s32.totalorder %s22, 1
      %p175 = por %p173, %p174
      %p176 = scmp.ne.s32.totalorder %s168, %s171
      %p177 = scmp.eq.s32.totalorder %s22, 0
      %p178 = por %p176, %p177
      %p179 = scmp.ne.s32.totalorder %s168, %s171
      %p180 = scmp.eq.s32.totalorder %s27, 1
      %p181 = por %p179, %p180
      %p182 = scmp.ne.s32.totalorder %s171, %s172
      %p183 = scmp.eq.s32.totalorder %s27, 0
      %p184 = por %p182, %p183
      %p185 = scmp.ne.s32.totalorder %s171, %s172
      %p186 = scmp.eq.s32.totalorder %s28, 1
      %p187 = por %p185, %p186
      %p189 = scmp.ne.s32.totalorder %s172, %s188
      %p190 = scmp.eq.s32.totalorder %s28, 0
      %p191 = por %p189, %p190
      %p192 = scmp.le.s32.totalorder 1, %s22
      %p193 = scmp.lt.s32.totalorder %s22, 3
      %p194 = pnand %p192, %p193
      %p195 = pneg %p194
      // Predicated region
      $region9: #{tpu_custom_call.1} parent=5 // pred_check
        _
      $region10: #{tpu_custom_call.1} parent=5 // pred_check_branch
        %197 = sbr.rel (%p194) target = $region12
      $region11: #{tpu_custom_call.1} parent=5 // pred_region
        %s198 = ssub.s32 %s22, 1
        // Predicated region
        $region13: #{tpu_custom_call.1} parent=11 // pred_check
          %p199 = pneg %p55
        $region14: #{tpu_custom_call.1} parent=11 // pred_check_branch
          %201 = sbr.rel (%p199) target = $region16
        $region15: #{tpu_custom_call.1} parent=11 // pred_region
          %203 = vsyncadd [#allocation5], 0
          %s205 = sshll.u32 %s0, 4
          %s206 = int_to_ptr.hbm [resolvable:$true] %s205
          %208 = dma.hbm_to_smem %s206, 16, [#allocation2], [#allocation5]
        $region16: #{tpu_custom_call.1} parent=11 // pred_fallthru
          _
        // Predicated region
        $region17: #{tpu_custom_call.1} parent=11 // pred_check
          %p209 = pneg %p76
        $region18: #{tpu_custom_call.1} parent=11 // pred_check_branch
          %211 = sbr.rel (%p209) target = $region20
        $region19: #{tpu_custom_call.1} parent=11 // pred_region
          %213 = vsyncadd [#allocation7], 0
          %s215 = sshll.u32 %s1, 4
          %s216 = int_to_ptr.hbm [resolvable:$true] %s215
          %218 = dma.hbm_to_smem %s216, 16, [#allocation6], [#allocation7]
        $region20: #{tpu_custom_call.1} parent=11 // pred_fallthru
          _
      $region12: #{tpu_custom_call.1} parent=5 // pred_fallthru
        _
      %p219 = scmp.lt.s32.totalorder %s22, 2
      // Predicated region
      $region21: #{tpu_custom_call.1} parent=5 // pred_check
        %p220 = pneg %p219
      $region22: #{tpu_custom_call.1} parent=5 // pred_check_branch
        %222 = sbr.rel (%p220) target = $region24
      $region23: #{tpu_custom_call.1} parent=5 // pred_region
        // Predicated region
        $region25: #{tpu_custom_call.1} parent=23 // pred_check
          %p223 = pneg %p96
        $region26: #{tpu_custom_call.1} parent=23 // pred_check_branch
          %225 = sbr.rel (%p223) target = $region28
        $region27: #{tpu_custom_call.1} parent=23 // pred_region
          %s226 = sand.u32 %s86, 1
          %s227 = scalar_lea.sflag [#allocation3], %s226
          %s228 = sand.u32 %s86, 1
          %s229 = scalar_lea.vmem [#allocation8], %s228
          %231 = vsyncadd %s227, 0
          %s232 = scalar_lea.hbm %s2, %s29
          %s234 = sshll.u32 %s232, 4
          %s235 = int_to_ptr.hbm [resolvable:$true] %s234
          %s236 = sshll.u32 %s229, 4
          %s237 = int_to_ptr.vmem [resolvable:$true] %s236
          %239 = dma.hbm_to_vmem [thread:$0]  %s235, 16, %s237, %s227
        $region28: #{tpu_custom_call.1} parent=23 // pred_fallthru
          _
        // Predicated region
        $region29: #{tpu_custom_call.1} parent=23 // pred_check
          %p240 = pneg %p122
        $region30: #{tpu_custom_call.1} parent=23 // pred_check_branch
          %242 = sbr.rel (%p240) target = $region32
        $region31: #{tpu_custom_call.1} parent=23 // pred_region
          %p243 = scmp.lt.s32.totalorder %s29, 1
          %s244 = scalar_select %p243, %s29, 1
          %s245 = scalar_lea.vmem %s3, %s244
        $region32: #{tpu_custom_call.1} parent=23 // pred_fallthru
          _
        // Predicated region
        $region33: #{tpu_custom_call.1} parent=23 // pred_check
          %p246 = pneg %p150
        $region34: #{tpu_custom_call.1} parent=23 // pred_check_branch
          %248 = sbr.rel (%p246) target = $region36
        $region35: #{tpu_custom_call.1} parent=23 // pred_region
          %s249 = sand.u32 %s140, 1
          %s250 = scalar_lea.sflag [#allocation10], %s249
          %s251 = sand.u32 %s140, 1
          %s252 = smul.addr %s251, 8
          %s253 = scalar_lea.vmem [#allocation9], %s252
          %s254 = smul.u32 2, %s30
          %256 = vsyncadd %s250, 0
          %s257 = smul.addr %s29, 2
          %s258 = sadd.s32 %s254, %s257
          %s259 = smul.addr %s258, 4
          %s260 = scalar_lea.hbm %s4, %s259
          %s262 = sshll.u32 %s260, 4
          %s263 = int_to_ptr.hbm [resolvable:$true] %s262
          %s264 = sshll.u32 %s253, 4
          %s265 = int_to_ptr.vmem [resolvable:$true] %s264
          %267 = dma.hbm_to_vmem [thread:$0]  %s263, 128, %s265, %s250
        $region36: #{tpu_custom_call.1} parent=23 // pred_fallthru
          _
      $region24: #{tpu_custom_call.1} parent=5 // pred_fallthru
        _
      %p268 = scmp.le.s32.totalorder 1, %s22
      %p269 = scmp.lt.s32.totalorder %s22, 3
      %p270 = pnand %p268, %p269
      %p271 = pneg %p270
      // Predicated region
      $region37: #{tpu_custom_call.1} parent=5 // pred_check
        _
      $region38: #{tpu_custom_call.1} parent=5 // pred_check_branch
        %273 = sbr.rel (%p270) target = $region40
      $region39: #{tpu_custom_call.1} parent=5 // pred_region
        %s274 = ssub.s32 %s22, 1
        // Predicated region
        $region41: #{tpu_custom_call.1} parent=39 // pred_check
          %p275 = pneg %p55
        $region42: #{tpu_custom_call.1} parent=39 // pred_check_branch
          %277 = sbr.rel (%p275) target = $region44
        $region43: #{tpu_custom_call.1} parent=39 // pred_region
          %279 = dma.done [#allocation5], 16
        $region44: #{tpu_custom_call.1} parent=39 // pred_fallthru
          _
        // Predicated region
        $region45: #{tpu_custom_call.1} parent=39 // pred_check
          %p280 = pneg %p76
        $region46: #{tpu_custom_call.1} parent=39 // pred_check_branch
          %282 = sbr.rel (%p280) target = $region48
        $region47: #{tpu_custom_call.1} parent=39 // pred_region
          %284 = dma.done [#allocation7], 16
        $region48: #{tpu_custom_call.1} parent=39 // pred_fallthru
          _
        %s285 = sand.u32 %s89, 1
        %s286 = scalar_lea.sflag [#allocation3], %s285
        %s287 = sand.u32 %s89, 1
        %s288 = scalar_lea.vmem [#allocation8], %s287
        // Predicated region
        $region49: #{tpu_custom_call.1} parent=39 // pred_check
          %p289 = pneg %p102
        $region50: #{tpu_custom_call.1} parent=39 // pred_check_branch
          %291 = sbr.rel (%p289) target = $region52
        $region51: #{tpu_custom_call.1} parent=39 // pred_region
          %293 = dma.done %s286, 16
        $region52: #{tpu_custom_call.1} parent=39 // pred_fallthru
          _
        %s294 = sand.u32 %s143, 1
        %s295 = scalar_lea.sflag [#allocation10], %s294
        %s296 = sand.u32 %s143, 1
        %s297 = smul.addr %s296, 8
        %s298 = scalar_lea.vmem [#allocation9], %s297
        // Predicated region
        $region53: #{tpu_custom_call.1} parent=39 // pred_check
          %p299 = pneg %p156
        $region54: #{tpu_custom_call.1} parent=39 // pred_check_branch
          %301 = sbr.rel (%p299) target = $region56
        $region55: #{tpu_custom_call.1} parent=39 // pred_region
          %303 = dma.done %s295, 128
        $region56: #{tpu_custom_call.1} parent=39 // pred_fallthru
          _
        %304 = sfence
        %p305 = pneg %p55
        %p306 = pneg %p52
        %p307 = pneg %p76
        %p308 = pneg %p73
        %s309 = sand.u32 %s89, 1
        %s310 = scalar_lea.sflag [#allocation3], %s309
        %s311 = sand.u32 %s89, 1
        %s312 = scalar_lea.vmem [#allocation8], %s311
        %p313 = pneg %p102
        %p314 = pneg %p99
        %p315 = scmp.lt.s32.totalorder %s31, 1
        %s316 = scalar_select %p315, %s31, 1
        %s317 = scalar_lea.vmem %s3, %s316
        %p318 = pneg %p128
        %p319 = pneg %p125
        %s320 = sand.u32 %s143, 1
        %s321 = scalar_lea.sflag [#allocation10], %s320
        %s322 = sand.u32 %s143, 1
        %s323 = smul.addr %s322, 8
        %s324 = scalar_lea.vmem [#allocation9], %s323
        %p325 = pneg %p156
        %p326 = pneg %p153
        %p327 = pneg %p184
        %p328 = pneg %p181
        %s329 = sand.u32 %s171, 1
        %s330 = scalar_lea.sflag [#allocation4], %s329
        %s331 = sand.u32 %s171, 1
        %s332 = smul.addr %s331, 8
        %s333 = scalar_lea.vmem [#allocation11], %s332
        %p334 = scmp.lt.s32.totalorder %s31, 1
        %s335 = scalar_select %p334, %s31, 1
        %s336 = scalar_lea.vmem %s3, %s335
        %s337 = smul.u32 2, %s32
        %s338 = smul.u32 2, %s32
        %v339 = vlaneseq
        %v340 = vshrl.u32 %v339, 7
        %v341 = vlaneseq
        %v342 = vand.u32 %v341, 127
        %v343 = vsub.s32 %v342, %v340
        %v344 = vld [vmem:[%s288] sm:$0x1]
        %v345 = vld [vmem:[%s336] sm:$0x1]
        %vm346 = vcmp.eq.s32.totalorder %v343, 4294967295
        %s347 = sld [smem:[#allocation2]]
        %v348 = vstv %s347
        %v349 = vsel %vm346, %v348, 0.0
        %vm350 = vcmp.eq.s32.totalorder %v343, 0
        %s351 = sld [smem:[#allocation2 + $0x1]]
        %v352 = vstv %s351
        %v353 = vsel %vm350, %v352, 0.0
        %v354 = vadd.f32 %v349, %v353
        %vm355 = vcmp.eq.s32.totalorder %v343, 1
        %s356 = sld [smem:[#allocation2 + $0x2]]
        %v357 = vstv %s356
        %v358 = vsel %vm355, %v357, 0.0
        %v359 = vadd.f32 %v354, %v358
        %v361 = vperm.slane %v344, 0
        %v363 = vmul.f32 %v359, %v361
        %vm364 = vcmask 27648
        %v365 = vsel %vm364, %v363, 0.0
        %366 = vadd.xlane.f32.xlu0 %v365
        %v367 = vpop.xlane.xlu0 %366
        %s368 = sld [smem:[#allocation6]]
        %v369 = vstv %s368
        %v370 = vsel %vm346, %v369, 0.0
        %s371 = sld [smem:[#allocation6 + $0x1]]
        %v372 = vstv %s371
        %v373 = vsel %vm350, %v372, 0.0
        %v374 = vadd.f32 %v370, %v373
        %s375 = sld [smem:[#allocation6 + $0x2]]
        %v376 = vstv %s375
        %v377 = vsel %vm355, %v376, 0.0
        %v378 = vadd.f32 %v374, %v377
        %v380 = vperm.slane %v345, 0
        %v382 = vmul.f32 %v378, %v380
        %v383 = vsel %vm364, %v382, 0.0
        %384 = vadd.xlane.f32.xlu0 %v383
        %v385 = vpop.xlane.xlu0 %384
        %vm386 = vcmp.gt.f32.partialorder %v385, 20.0
        %v387 = vmin.f32 %v385, 20.0
        %v388 = vmul.f32 %v387, 1.442695
        %v389 = vpow.pop %v388
        %v390 = vadd.f32 %v389, 1.0
        %v391 = vlog2.pop %v390
        %v392 = vmul.f32 %v391, 0.6931472
        %v393 = vsel %vm386, %v385, %v392
        %v394 = vld [vmem:[%s298] sm:$0xff]
        %v397 = vunpack.c.l.s4 839922192
        %v398 = vunpack.c.0.s8 %v397
        %v399 = vperm.slane %v393, %v398
        %v401 = vmul.f32 %v394, %v399
        %v404 = vunpack.c.l.s4 839922192
        %v405 = vunpack.c.0.s8 %v404
        %v406 = vperm.slane %v367, %v405
        %v408 = vadd.f32 %v401, %v406
        %409 = vst [vmem:[%s333] sm:$0xff] %v408
        %s410 = sand.u32 %s171, 1
        %s411 = scalar_lea.sflag [#allocation4], %s410
        %s412 = sand.u32 %s171, 1
        %s413 = smul.addr %s412, 8
        %s414 = scalar_lea.vmem [#allocation11], %s413
        // Predicated region
        $region57: #{tpu_custom_call.1} parent=39 // pred_check
          %p415 = pneg %p181
        $region58: #{tpu_custom_call.1} parent=39 // pred_check_branch
          %417 = sbr.rel (%p415) target = $region60
        $region59: #{tpu_custom_call.1} parent=39 // pred_region
          %s418 = smul.u32 2, %s32
          %420 = vsyncadd %s411, 0
          %s421 = smul.addr %s31, 2
          %s422 = sadd.s32 %s418, %s421
          %s423 = smul.addr %s422, 4
          %s424 = scalar_lea.hbm %s5, %s423
          %s426 = sshll.u32 %s414, 4
          %s427 = int_to_ptr.vmem [resolvable:$true] %s426
          %s428 = sshll.u32 %s424, 4
          %s429 = int_to_ptr.hbm [resolvable:$true] %s428
          %431 = dma.vmem_to_hbm [thread:$0]  %s427, 128, %s429, %s411
        $region60: #{tpu_custom_call.1} parent=39 // pred_fallthru
          _
      $region40: #{tpu_custom_call.1} parent=5 // pred_fallthru
        _
      %p432 = scmp.le.s32.totalorder 2, %s22
      // Predicated region
      $region61: #{tpu_custom_call.1} parent=5 // pred_check
        %p433 = pneg %p432
      $region62: #{tpu_custom_call.1} parent=5 // pred_check_branch
        %435 = sbr.rel (%p433) target = $region64
      $region63: #{tpu_custom_call.1} parent=5 // pred_region
        %s436 = ssub.s32 %s22, 2
        // Predicated region
        $region65: #{tpu_custom_call.1} parent=63 // pred_check
          %p437 = pneg %p187
        $region66: #{tpu_custom_call.1} parent=63 // pred_check_branch
          %439 = sbr.rel (%p437) target = $region68
        $region67: #{tpu_custom_call.1} parent=63 // pred_region
          %s440 = sand.u32 %s172, 1
          %s441 = scalar_lea.sflag [#allocation4], %s440
          %s442 = sand.u32 %s172, 1
          %s443 = smul.addr %s442, 8
          %s444 = scalar_lea.vmem [#allocation11], %s443
          %446 = dma.done %s441, 128
        $region68: #{tpu_custom_call.1} parent=63 // pred_fallthru
          _
      $region64: #{tpu_custom_call.1} parent=5 // pred_fallthru
        _
    $region6: #{tpu_custom_call.1} parent=1 // loop_footer
      %s26 = sadd.s32 1, %s22
    $region7: #{tpu_custom_call.1} parent=1 // loop_footer_branch
      %21 = sbr.rel target = $region3
    $region8: #{tpu_custom_call.1} parent=1 // loop_exit
      _
    %447 = vsyncpa [#allocation3], 1
    %s448 = scalar_lea.sflag [#allocation3], 1
    %449 = vsyncpa %s448, 1
    %450 = vsyncpa [#allocation10], 1
    %s451 = scalar_lea.sflag [#allocation10], 1
    %452 = vsyncpa %s451, 1
    %453 = vsyncpa [#allocation4], 1
    %s454 = scalar_lea.sflag [#allocation4], 1
    %455 = vsyncpa %s454, 1
    %456 = vsyncpa [#allocation5], 1
    %s457 = scalar_lea.sflag [#allocation5], 1
    %458 = vsyncpa %s457, 1
    %459 = vsyncpa [#allocation7], 1

</llo_original>
